<compile_context>
chip_gen: v5e
topology: v5e:2x2
jax: 0.10.0
libtpu: 0.0.40
codegen_flags: <defaults>
</compile_context>

<pallas_src>
import jax
import jax.numpy as jnp
from jax import lax
from jax.experimental import pallas as pl
from jax.experimental.pallas import tpu as pltpu

P_DROP = 0.1
KEEP_SCALE = 1.0 / (1.0 - P_DROP)            # python float -> weak-typed literal
THRESH_31 = int(round(P_DROP * (1 << 31)))   # drop iff 31-bit draw < this
THRESH_32 = int(round(P_DROP * (1 << 32)))   # drop iff 32-bit draw < this


def dropout_kernel_prng(seed_ref, x_ref, o_ref):
    """TPU path: hardware PRNG; ~2-3 vector-ALU ops per element."""
    # Per-block seed so every grid block draws an independent stream.
    pltpu.prng_seed(seed_ref[0], pl.program_id(0))
    bits = pltpu.prng_random_bits(x_ref.shape)
    # Mask the sign bit so the compare is correct whether bits are i32 or u32.
    draw = bits & 0x7FFFFFFF
    keep = draw >= THRESH_31
    o_ref[...] = jnp.where(keep, x_ref[...] * KEEP_SCALE, 0.0).astype(o_ref.dtype)


def dropout_kernel_hash(seed_ref, x_ref, o_ref):
    """Portable fallback (interpret mode / non-TPU): stateless uint32 hash."""
    rows, cols = (int(d) for d in x_ref.shape)
    base_row = pl.program_id(0) * rows
    row = (lax.broadcasted_iota(jnp.int32, (rows, cols), 0) + base_row).astype(jnp.uint32)
    col = lax.broadcasted_iota(jnp.int32, (rows, cols), 1).astype(jnp.uint32)
    if cols & (cols - 1) == 0:                      # cols == 256 here: cheap shift/or
        idx = (row << (cols.bit_length() - 1)) | col
    else:
        idx = row * cols + col
    seed = seed_ref[0].astype(jnp.uint32)
    # FNV-style seed mix + xor-shift-multiply avalanche (unsigned wrap is exact).
    h = idx ^ (seed * 0x01000193)
    h = ((h >> 16) ^ h) * 0x045D9F3B
    h = ((h >> 16) ^ h) * 0x045D9F3B
    h = (h >> 16) ^ h
    keep = h >= THRESH_32                           # uniform u32 draw; keep prob ~ 1-p
    o_ref[...] = jnp.where(keep, x_ref[...] * KEEP_SCALE, 0.0).astype(o_ref.dtype)


def _block_rows(rows):
    if rows % 8 == 0:
        for cand in (128, 96, 64, 32, 16, 8):
            if rows % cand == 0:
                return cand
    return rows


def pallas_dropout(x, seed_scalar):
    """Training-mode dropout(p=0.1): drop each element w.p. p, scale by 1/(1-p)."""
    orig_shape = x.shape
    H = int(x.shape[-1])
    rows = x.size // H
    x2d = x.reshape(rows, H)                        # lane-dense (rows, 256) slab
    seed = jnp.asarray([seed_scalar], dtype=jnp.int32)

    br = _block_rows(rows)
    grid = (rows // br,)

    def run(kernel):
        out2d = pl.pallas_call(
            kernel,
            out_shape=jax.ShapeDtypeStruct((rows, H), x.dtype),
            grid=grid,
            in_specs=[
                pl.BlockSpec(memory_space=pltpu.MemorySpace.SMEM),   # seed scalar
                pl.BlockSpec((br, H), lambda i: (i, 0)),             # x row-block
            ],
            out_specs=pl.BlockSpec((br, H), lambda i: (i, 0)),
            compiler_params=pltpu.CompilerParams(
                dimension_semantics=("parallel",)),
        )(seed, x2d)
        return jax.block_until_ready(out2d)

    if jax.default_backend() == "tpu":
        try:
            out2d = run(dropout_kernel_prng)        # fast hardware-PRNG path
        except Exception:                           # e.g. forced interpret mode
            out2d = run(dropout_kernel_hash)
    else:
        out2d = run(dropout_kernel_hash)            # interpret / CPU fallback

    return out2d.reshape(orig_shape)


if __name__ == "__main__":
    key = jax.random.PRNGKey(0)
    # Same shape as the PyTorch module's input x404: [1, 384, 256]
    x = jax.random.normal(key, (1, 384, 256), dtype=jnp.float32)

    out = pallas_dropout(x, seed_scalar=0)
    out = jax.block_until_ready(out)

    # Sanity checks: shape/dtype match; kept elements are x * 1/(1-p);
    # keep fraction near 1 - p = 0.9.
    assert out.shape == x.shape and out.dtype == x.dtype
    kept = out != 0.0
    keep_frac = float(jnp.mean(kept.astype(jnp.float32)))
    assert 0.85 < keep_frac < 0.95, f"unexpected keep fraction {keep_frac}"
    expected_kept = jnp.where(kept, x * KEEP_SCALE, 0.0)
    got_kept = jnp.where(kept, out, 0.0)
    assert bool(jnp.allclose(got_kept, expected_kept, rtol=1e-6, atol=1e-6)), \
        "kept elements are not scaled by 1/(1-p)"

    print("KERNEL_OK")
</pallas_src>

<mosaic_0001>
module attributes {stable_mosaic.version = 11 : i64} {
  func.func @dropout_kernel_hash(%arg0: i32, %arg1: memref<1xi32, #tpu.memory_space<smem>>, %arg2: memref<128x256xf32, #tpu.memory_space<vmem>>, %arg3: memref<128x256xf32, #tpu.memory_space<vmem>>) attributes {dimension_semantics = [#tpu.dimension_semantics<parallel>], iteration_bounds = array<i64: 3>, scalar_prefetch = 0 : i64, scratch_operands = 0 : i64, tpu.core_type = #tpu.core_type<tc>, window_params = [{transform_indices = @transform_0, window_bounds = array<i64: 1>}, {transform_indices = @transform_1, window_bounds = array<i64: 128, 256>}, {transform_indices = @transform_2, window_bounds = array<i64: 128, 256>}]} {
    %c128_i32 = arith.constant 128 : i32
    %0 = arith.muli %arg0, %c128_i32 : i32
    %1 = tpu.iota {dimensions = array<i32: 0>} : vector<128x256xi32>
    %2 = vector.broadcast %0 : i32 to vector<128x256xi32>
    %3 = arith.addi %1, %2 : vector<128x256xi32>
    %4 = tpu.iota {dimensions = array<i32: 1>} : vector<128x256xi32>
    %c8_i32 = arith.constant 8 : i32
    %5 = vector.broadcast %c8_i32 : i32 to vector<128x256xi32>
    %6 = arith.shli %3, %5 : vector<128x256xi32>
    %7 = arith.ori %6, %4 : vector<128x256xi32>
    %c0 = arith.constant 0 : index
    %8 = memref.load %arg1[%c0] : memref<1xi32, #tpu.memory_space<smem>>
    %c16777619_i32 = arith.constant 16777619 : i32
    %9 = arith.muli %8, %c16777619_i32 : i32
    %10 = vector.broadcast %9 : i32 to vector<128x256xi32>
    %11 = arith.xori %7, %10 : vector<128x256xi32>
    %c16_i32 = arith.constant 16 : i32
    %12 = vector.broadcast %c16_i32 : i32 to vector<128x256xi32>
    %13 = arith.shrui %11, %12 : vector<128x256xi32>
    %14 = arith.xori %13, %11 : vector<128x256xi32>
    %c73244475_i32 = arith.constant 73244475 : i32
    %15 = vector.broadcast %c73244475_i32 : i32 to vector<128x256xi32>
    %16 = arith.muli %14, %15 : vector<128x256xi32>
    %c16_i32_0 = arith.constant 16 : i32
    %17 = vector.broadcast %c16_i32_0 : i32 to vector<128x256xi32>
    %18 = arith.shrui %16, %17 : vector<128x256xi32>
    %19 = arith.xori %18, %16 : vector<128x256xi32>
    %c73244475_i32_1 = arith.constant 73244475 : i32
    %20 = vector.broadcast %c73244475_i32_1 : i32 to vector<128x256xi32>
    %21 = arith.muli %19, %20 : vector<128x256xi32>
    %c16_i32_2 = arith.constant 16 : i32
    %22 = vector.broadcast %c16_i32_2 : i32 to vector<128x256xi32>
    %23 = arith.shrui %21, %22 : vector<128x256xi32>
    %24 = arith.xori %23, %21 : vector<128x256xi32>
    %c429496730_i32 = arith.constant 429496730 : i32
    %25 = vector.broadcast %c429496730_i32 : i32 to vector<128x256xi32>
    %26 = arith.cmpi uge, %24, %25 : vector<128x256xi32>
    %c0_3 = arith.constant 0 : index
    %c0_4 = arith.constant 0 : index
    %27 = vector.load %arg2[%c0_3, %c0_4] : memref<128x256xf32, #tpu.memory_space<vmem>>, vector<128x256xf32>
    %cst = arith.constant 1.11111116 : f32
    %28 = vector.broadcast %cst : f32 to vector<128x256xf32>
    %29 = arith.mulf %27, %28 : vector<128x256xf32>
    %cst_5 = arith.constant 0.000000e+00 : f32
    %30 = vector.broadcast %cst_5 : f32 to vector<128x256xf32>
    %31 = arith.select %26, %29, %30 : vector<128x256xi1>, vector<128x256xf32>
    %c0_6 = arith.constant 0 : index
    %c0_7 = arith.constant 0 : index
    %32 = vector.load %arg3[%c0_6, %c0_7] : memref<128x256xf32, #tpu.memory_space<vmem>>, vector<128x256xf32>
    tpu.vector_store %arg3[%c0_6, %c0_7], %31 {strides = array<i32>} : memref<128x256xf32, #tpu.memory_space<vmem>>, vector<128x256xf32>,
    return
  }
  func.func @transform_0(%arg0: i32) -> i32 {
    %c0_i32 = arith.constant 0 : i32
    %c0_i32_0 = arith.constant 0 : i32
    return %c0_i32 : i32
  }
  func.func @transform_1(%arg0: i32) -> (i32, i32) {
    %c0_i32 = arith.constant 0 : i32
    %c0_i32_0 = arith.constant 0 : i32
    return %arg0, %c0_i32 : i32, i32
  }
  func.func @transform_2(%arg0: i32) -> (i32, i32) {
    %c0_i32 = arith.constant 0 : i32
    %c0_i32_0 = arith.constant 0 : i32
    return %arg0, %c0_i32 : i32, i32
  }
}

</mosaic_0001>

<llo_original>
// kernel: tpu_custom_call.1
$region0: #{tpu_custom_call.1}
  #allocation0 [shape = 'u32[]', space=smem, size = 0x4, offset = 0x4, fixed_abs, tag = 'smem constant byte address 0x4 - core index']
  #allocation1 [shape = 'u32[72,128]{1,0:T(1,128)}', space=vmem, size = 0x9000, scoped, tag = 'internal scratch']
  #allocation2 [shape = 's32[1]{0:T(128)S(6)}', space=smem, size = 0x200, scoped, tag = 'scoped memory for tpu_custom_call.1']
  %s0 = inlined_call_operand.<no memory space> [shape: s32[1], index: 0, kind: input, shape index: {}]
  %s1 = inlined_call_operand.hbm [shape: f32[384,256], index: 1, kind: input, shape index: {}]
  %s2 = inlined_call_operand.hbm [shape: f32[384,256], index: 2, kind: output, shape index: {}]
  %s3 = sld [smem:[#allocation0]]
  $region45: #{tpu_custom_call.1} parent=0
    _
  %s5 = ssub.s32 1, %s3
  %s6 = scalar_select 0, %s5, %s3
  %7 = sst [smem:[#allocation2]] %s0
  $region1: #{tpu_custom_call.1} parent=0
    #allocation3 [shape = 'u8[262144]{0}', space=vmem, size = 0x40000, scoped, tag = 'input window, operand 1']
    #allocation4 [shape = 's32[2]{0}', space=sflag, size = 0x8, scoped, tag = 'scoped memory for tpu_custom_call.1']
    #allocation5 [shape = 's32[2]{0}', space=sflag, size = 0x8, scoped, tag = 'scoped memory for tpu_custom_call.1']
    #allocation6 [shape = 'u8[262144]{0}', space=vmem, size = 0x40000, scoped, tag = 'output window, operand 0']
    %8 = vsyncpa [#allocation4], 0
    %s9 = scalar_lea.sflag [#allocation4], 1
    %10 = vsyncpa %s9, 0
    %11 = vsyncpa [#allocation5], 0
    %s12 = scalar_lea.sflag [#allocation5], 1
    %13 = vsyncpa %s12, 0
    loop: start=0, step=1, limit=5
    $region2: #{tpu_custom_call.1} parent=1 // loop_pre_header
      _
    $region3: #{tpu_custom_call.1} parent=1 // loop_header
      %s15 = sphi 0, %s19
      %p16 = scmp.ge.s32.totalorder %s15, 5
      %s23 = sphi 0, %s23
      %s25 = sphi 0, %s23
      %s26 = sphi 0, %s25
      %s40 = sphi 0, %s26
      %s46 = sphi 0, %s48
      %s49 = sphi 0, %s46
      %s50 = sphi 0, %s49
      %s66 = sphi 0, %s50
      %s72 = sphi 0, %s74
      %s75 = sphi 0, %s72
      %s76 = sphi 0, %s75
      %s92 = sphi 0, %s76
    $region4: #{tpu_custom_call.1} parent=1 // loop_header_branch
      %18 = sbr.rel (%p16) target = $region8
    $region5: #{tpu_custom_call.1} parent=1 // loop_body
      %s20 = ssub.s32 %s15, 1
      %s21 = ssub.s32 %s15, 2
      %s22 = sadd.s32 %s15, 1
      %s24 = sadd.s32 %s23, 1
      %p27 = scmp.eq.s32.totalorder %s15, 2
      %p28 = scmp.ne.s32.totalorder %s23, %s25
      %p29 = scmp.eq.s32.totalorder %s15, 0
      %p30 = por %p28, %p29
      %p31 = scmp.ne.s32.totalorder %s23, %s25
      %p32 = scmp.eq.s32.totalorder %s20, 2
      %p33 = por %p31, %p32
      %p34 = scmp.ne.s32.totalorder %s25, %s26
      %p35 = scmp.eq.s32.totalorder %s20, 0
      %p36 = por %p34, %p35
      %p37 = scmp.ne.s32.totalorder %s25, %s26
      %p38 = scmp.eq.s32.totalorder %s21, 2
      %p39 = por %p37, %p38
      %p41 = scmp.ne.s32.totalorder %s26, %s40
      %p42 = scmp.eq.s32.totalorder %s21, 0
      %p43 = por %p41, %p42
      %s44 = ssub.s32 %s15, %s22
      %p45 = scmp.eq.s32.totalorder %s44, 0
      %s47 = sadd.s32 %s46, 1
      %s48 = scalar_select %p45, %s46, %s47
      %p51 = pneg %p45
      %p52 = scmp.eq.s32.totalorder %s15, 2
      %p53 = por %p51, %p52
      %p54 = scmp.ne.s32.totalorder %s46, %s49
      %p55 = scmp.eq.s32.totalorder %s15, 0
      %p56 = por %p54, %p55
      %p57 = scmp.ne.s32.totalorder %s46, %s49
      %p58 = scmp.eq.s32.totalorder %s20, 2
      %p59 = por %p57, %p58
      %p60 = scmp.ne.s32.totalorder %s49, %s50
      %p61 = scmp.eq.s32.totalorder %s20, 0
      %p62 = por %p60, %p61
      %p63 = scmp.ne.s32.totalorder %s49, %s50
      %p64 = scmp.eq.s32.totalorder %s21, 2
      %p65 = por %p63, %p64
      %p67 = scmp.ne.s32.totalorder %s50, %s66
      %p68 = scmp.eq.s32.totalorder %s21, 0
      %p69 = por %p67, %p68
      %s70 = ssub.s32 %s15, %s22
      %p71 = scmp.eq.s32.totalorder %s70, 0
      %s73 = sadd.s32 %s72, 1
      %s74 = scalar_select %p71, %s72, %s73
      %p77 = pneg %p71
      %p78 = scmp.eq.s32.totalorder %s15, 2
      %p79 = por %p77, %p78
      %p80 = scmp.ne.s32.totalorder %s72, %s75
      %p81 = scmp.eq.s32.totalorder %s15, 0
      %p82 = por %p80, %p81
      %p83 = scmp.ne.s32.totalorder %s72, %s75
      %p84 = scmp.eq.s32.totalorder %s20, 2
      %p85 = por %p83, %p84
      %p86 = scmp.ne.s32.totalorder %s75, %s76
      %p87 = scmp.eq.s32.totalorder %s20, 0
      %p88 = por %p86, %p87
      %p89 = scmp.ne.s32.totalorder %s75, %s76
      %p90 = scmp.eq.s32.totalorder %s21, 2
      %p91 = por %p89, %p90
      %p93 = scmp.ne.s32.totalorder %s76, %s92
      %p94 = scmp.eq.s32.totalorder %s21, 0
      %p95 = por %p93, %p94
      %p96 = scmp.le.s32.totalorder 1, %s15
      %p97 = scmp.lt.s32.totalorder %s15, 4
      %p98 = pnand %p96, %p97
      %p99 = pneg %p98
      // Predicated region
      $region9: #{tpu_custom_call.1} parent=5 // pred_check
        _
      $region10: #{tpu_custom_call.1} parent=5 // pred_check_branch
        %101 = sbr.rel (%p98) target = $region12
      $region11: #{tpu_custom_call.1} parent=5 // pred_region
        %s102 = ssub.s32 %s15, 1
        // Predicated region
        $region13: #{tpu_custom_call.1} parent=11 // pred_check
          %p103 = pneg %p36
        $region14: #{tpu_custom_call.1} parent=11 // pred_check_branch
          %105 = sbr.rel (%p103) target = $region16
        $region15: #{tpu_custom_call.1} parent=11 // pred_region
          _
        $region16: #{tpu_custom_call.1} parent=11 // pred_fallthru
          _
      $region12: #{tpu_custom_call.1} parent=5 // pred_fallthru
        _
      %p106 = scmp.lt.s32.totalorder %s15, 3
      // Predicated region
      $region17: #{tpu_custom_call.1} parent=5 // pred_check
        %p107 = pneg %p106
      $region18: #{tpu_custom_call.1} parent=5 // pred_check_branch
        %109 = sbr.rel (%p107) target = $region20
      $region19: #{tpu_custom_call.1} parent=5 // pred_region
        // Predicated region
        $region21: #{tpu_custom_call.1} parent=19 // pred_check
          %p110 = pneg %p56
        $region22: #{tpu_custom_call.1} parent=19 // pred_check_branch
          %112 = sbr.rel (%p110) target = $region24
        $region23: #{tpu_custom_call.1} parent=19 // pred_region
          %s113 = sand.u32 %s46, 1
          %s114 = scalar_lea.sflag [#allocation4], %s113
          %s115 = sand.u32 %s46, 1
          %s116 = smul.addr %s115, 256
          %s117 = scalar_lea.vmem [#allocation3], %s116
          %s118 = smul.u32 16, %s15
          %120 = vsyncadd %s114, 0
          %s121 = smul.addr %s118, 2
          %s122 = smul.addr %s121, 8
          %s123 = scalar_lea.hbm %s1, %s122
          %s124 = sshll.u32 %s123, 4
          %s125 = int_to_ptr.hbm [resolvable:$true] %s124
          %s126 = sshll.u32 %s117, 4
          %s127 = int_to_ptr.vmem [resolvable:$true] %s126
          %132 = dma.hbm_to_vmem [thread:$0]  %s125, 4096, %s127, %s114, 256, 256, 16
        $region24: #{tpu_custom_call.1} parent=19 // pred_fallthru
          _
      $region20: #{tpu_custom_call.1} parent=5 // pred_fallthru
        _
      %p133 = scmp.le.s32.totalorder 1, %s15
      %p134 = scmp.lt.s32.totalorder %s15, 4
      %p135 = pnand %p133, %p134
      %p136 = pneg %p135
      // Predicated region
      $region25: #{tpu_custom_call.1} parent=5 // pred_check
        _
      $region26: #{tpu_custom_call.1} parent=5 // pred_check_branch
        %138 = sbr.rel (%p135) target = $region28
      $region27: #{tpu_custom_call.1} parent=5 // pred_region
        %s139 = ssub.s32 %s15, 1
        %s140 = sand.u32 %s49, 1
        %s141 = scalar_lea.sflag [#allocation4], %s140
        %s142 = sand.u32 %s49, 1
        %s143 = smul.addr %s142, 256
        %s144 = scalar_lea.vmem [#allocation3], %s143
        // Predicated region
        $region29: #{tpu_custom_call.1} parent=27 // pred_check
          %p145 = pneg %p62
        $region30: #{tpu_custom_call.1} parent=27 // pred_check_branch
          %147 = sbr.rel (%p145) target = $region32
        $region31: #{tpu_custom_call.1} parent=27 // pred_region
          %149 = dma.done %s141, 4096
        $region32: #{tpu_custom_call.1} parent=27 // pred_fallthru
          _
        %p150 = pneg %p36
        %p151 = pneg %p33
        %s152 = sand.u32 %s49, 1
        %s153 = scalar_lea.sflag [#allocation4], %s152
        %s154 = sand.u32 %s49, 1
        %s155 = smul.addr %s154, 256
        %s156 = scalar_lea.vmem [#allocation3], %s155
        %p157 = pneg %p62
        %p158 = pneg %p59
        %p159 = pneg %p88
        %p160 = pneg %p85
        %s161 = sand.u32 %s75, 1
        %s162 = scalar_lea.sflag [#allocation5], %s161
        %s163 = sand.u32 %s75, 1
        %s164 = smul.addr %s163, 256
        %s165 = scalar_lea.vmem [#allocation6], %s164
        %s166 = smul.u32 16, %s20
        %s167 = smul.u32 16, %s20
        %s168 = smul.u32 %s20, 128
        %v169 = vlaneseq
        %v170 = vshrl.u32 %v169, 7
        %v171 = vadd.s32 %v170, 8
        %v172 = vadd.s32 %v170, 16
        %v173 = vadd.s32 %v170, 24
        %v174 = vadd.s32 %v170, 32
        %v175 = vadd.s32 %v170, 40
        %v176 = vadd.s32 %v170, 48
        %v177 = vadd.s32 %v170, 56
        %v178 = vadd.s32 %v170, 64
        %v179 = vadd.s32 %v170, 72
        %v180 = vadd.s32 %v170, 80
        %v181 = vadd.s32 %v170, 88
        %v182 = vadd.s32 %v170, 96
        %v183 = vadd.s32 %v170, 104
        %v184 = vadd.s32 %v170, 112
        %v185 = vadd.s32 %v170, 120
        %v186 = vstv %s168
        %v187 = vadd.s32 %v170, %v186
        %v188 = vadd.s32 %v171, %v186
        %v189 = vadd.s32 %v172, %v186
        %v190 = vadd.s32 %v173, %v186
        %v191 = vadd.s32 %v174, %v186
        %v192 = vadd.s32 %v175, %v186
        %v193 = vadd.s32 %v176, %v186
        %v194 = vadd.s32 %v177, %v186
        %v195 = vadd.s32 %v178, %v186
        %v196 = vadd.s32 %v179, %v186
        %v197 = vadd.s32 %v180, %v186
        %v198 = vadd.s32 %v181, %v186
        %v199 = vadd.s32 %v182, %v186
        %v200 = vadd.s32 %v183, %v186
        %v201 = vadd.s32 %v184, %v186
        %v202 = vadd.s32 %v185, %v186
        %v203 = vlaneseq
        %v204 = vand.u32 %v203, 127
        %v205 = vadd.s32 %v204, 128
        %v206 = vshll.u32 %v187, 8
        %v207 = vshll.u32 %v188, 8
        %v208 = vshll.u32 %v189, 8
        %v209 = vshll.u32 %v190, 8
        %v210 = vshll.u32 %v191, 8
        %v211 = vshll.u32 %v192, 8
        %v212 = vshll.u32 %v193, 8
        %v213 = vshll.u32 %v194, 8
        %v214 = vshll.u32 %v195, 8
        %v215 = vshll.u32 %v196, 8
        %v216 = vshll.u32 %v197, 8
        %v217 = vshll.u32 %v198, 8
        %v218 = vshll.u32 %v199, 8
        %v219 = vshll.u32 %v200, 8
        %v220 = vshll.u32 %v201, 8
        %v221 = vshll.u32 %v202, 8
        %v222 = vor.u32 %v206, %v204
        %v223 = vor.u32 %v206, %v205
        %v224 = vor.u32 %v207, %v204
        %v225 = vor.u32 %v207, %v205
        %v226 = vor.u32 %v208, %v204
        %v227 = vor.u32 %v208, %v205
        %v228 = vor.u32 %v209, %v204
        %v229 = vor.u32 %v209, %v205
        %v230 = vor.u32 %v210, %v204
        %v231 = vor.u32 %v210, %v205
        %v232 = vor.u32 %v211, %v204
        %v233 = vor.u32 %v211, %v205
        %v234 = vor.u32 %v212, %v204
        %v235 = vor.u32 %v212, %v205
        %v236 = vor.u32 %v213, %v204
        %v237 = vor.u32 %v213, %v205
        %v238 = vor.u32 %v214, %v204
        %v239 = vor.u32 %v214, %v205
        %v240 = vor.u32 %v215, %v204
        %v241 = vor.u32 %v215, %v205
        %v242 = vor.u32 %v216, %v204
        %v243 = vor.u32 %v216, %v205
        %v244 = vor.u32 %v217, %v204
        %v245 = vor.u32 %v217, %v205
        %v246 = vor.u32 %v218, %v204
        %v247 = vor.u32 %v218, %v205
        %v248 = vor.u32 %v219, %v204
        %v249 = vor.u32 %v219, %v205
        %v250 = vor.u32 %v220, %v204
        %v251 = vor.u32 %v220, %v205
        %v252 = vor.u32 %v221, %v204
        %v253 = vor.u32 %v221, %v205
        %s254 = sld [smem:[#allocation2]]
        %s255 = smul.u32 %s254, 16777619
        %v256 = vstv %s255
        %v257 = vxor.u32 %v222, %v256
        %v258 = vxor.u32 %v223, %v256
        %v259 = vxor.u32 %v224, %v256
        %v260 = vxor.u32 %v225, %v256
        %v261 = vxor.u32 %v226, %v256
        %v262 = vxor.u32 %v227, %v256
        %v263 = vxor.u32 %v228, %v256
        %v264 = vxor.u32 %v229, %v256
        %v265 = vxor.u32 %v230, %v256
        %v266 = vxor.u32 %v231, %v256
        %v267 = vxor.u32 %v232, %v256
        %v268 = vxor.u32 %v233, %v256
        %v269 = vxor.u32 %v234, %v256
        %v270 = vxor.u32 %v235, %v256
        %v271 = vxor.u32 %v236, %v256
        %v272 = vxor.u32 %v237, %v256
        %v273 = vxor.u32 %v238, %v256
        %v274 = vxor.u32 %v239, %v256
        %v275 = vxor.u32 %v240, %v256
        %v276 = vxor.u32 %v241, %v256
        %v277 = vxor.u32 %v242, %v256
        %v278 = vxor.u32 %v243, %v256
        %v279 = vxor.u32 %v244, %v256
        %v280 = vxor.u32 %v245, %v256
        %v281 = vxor.u32 %v246, %v256
        %v282 = vxor.u32 %v247, %v256
        %v283 = vxor.u32 %v248, %v256
        %v284 = vxor.u32 %v249, %v256
        %v285 = vxor.u32 %v250, %v256
        %v286 = vxor.u32 %v251, %v256
        %v287 = vxor.u32 %v252, %v256
        %v288 = vxor.u32 %v253, %v256
        %v289 = vshrl.u32 %v257, 16
        %v290 = vshrl.u32 %v258, 16
        %v291 = vshrl.u32 %v259, 16
        %v292 = vshrl.u32 %v260, 16
        %v293 = vshrl.u32 %v261, 16
        %v294 = vshrl.u32 %v262, 16
        %v295 = vshrl.u32 %v263, 16
        %v296 = vshrl.u32 %v264, 16
        %v297 = vshrl.u32 %v265, 16
        %v298 = vshrl.u32 %v266, 16
        %v299 = vshrl.u32 %v267, 16
        %v300 = vshrl.u32 %v268, 16
        %v301 = vshrl.u32 %v269, 16
        %v302 = vshrl.u32 %v270, 16
        %v303 = vshrl.u32 %v271, 16
        %v304 = vshrl.u32 %v272, 16
        %v305 = vshrl.u32 %v273, 16
        %v306 = vshrl.u32 %v274, 16
        %v307 = vshrl.u32 %v275, 16
        %v308 = vshrl.u32 %v276, 16
        %v309 = vshrl.u32 %v277, 16
        %v310 = vshrl.u32 %v278, 16
        %v311 = vshrl.u32 %v279, 16
        %v312 = vshrl.u32 %v280, 16
        %v313 = vshrl.u32 %v281, 16
        %v314 = vshrl.u32 %v282, 16
        %v315 = vshrl.u32 %v283, 16
        %v316 = vshrl.u32 %v284, 16
        %v317 = vshrl.u32 %v285, 16
        %v318 = vshrl.u32 %v286, 16
        %v319 = vshrl.u32 %v287, 16
        %v320 = vshrl.u32 %v288, 16
        %v321 = vxor.u32 %v289, %v257
        %v322 = vxor.u32 %v290, %v258
        %v323 = vxor.u32 %v291, %v259
        %v324 = vxor.u32 %v292, %v260
        %v325 = vxor.u32 %v293, %v261
        %v326 = vxor.u32 %v294, %v262
        %v327 = vxor.u32 %v295, %v263
        %v328 = vxor.u32 %v296, %v264
        %v329 = vxor.u32 %v297, %v265
        %v330 = vxor.u32 %v298, %v266
        %v331 = vxor.u32 %v299, %v267
        %v332 = vxor.u32 %v300, %v268
        %v333 = vxor.u32 %v301, %v269
        %v334 = vxor.u32 %v302, %v270
        %v335 = vxor.u32 %v303, %v271
        %v336 = vxor.u32 %v304, %v272
        %v337 = vxor.u32 %v305, %v273
        %v338 = vxor.u32 %v306, %v274
        %v339 = vxor.u32 %v307, %v275
        %v340 = vxor.u32 %v308, %v276
        %v341 = vxor.u32 %v309, %v277
        %v342 = vxor.u32 %v310, %v278
        %v343 = vxor.u32 %v311, %v279
        %v344 = vxor.u32 %v312, %v280
        %v345 = vxor.u32 %v313, %v281
        %v346 = vxor.u32 %v314, %v282
        %v347 = vxor.u32 %v315, %v283
        %v348 = vxor.u32 %v316, %v284
        %v349 = vxor.u32 %v317, %v285
        %v350 = vxor.u32 %v318, %v286
        %v351 = vxor.u32 %v319, %v287
        %v352 = vxor.u32 %v320, %v288
        %v353 = vmul.u32 %v321, 73244475
        %v354 = vmul.u32 %v322, 73244475
        %v355 = vmul.u32 %v323, 73244475
        %v356 = vmul.u32 %v324, 73244475
        %v357 = vmul.u32 %v325, 73244475
        %v358 = vmul.u32 %v326, 73244475
        %v359 = vmul.u32 %v327, 73244475
        %v360 = vmul.u32 %v328, 73244475
        %v361 = vmul.u32 %v329, 73244475
        %v362 = vmul.u32 %v330, 73244475
        %v363 = vmul.u32 %v331, 73244475
        %v364 = vmul.u32 %v332, 73244475
        %v365 = vmul.u32 %v333, 73244475
        %v366 = vmul.u32 %v334, 73244475
        %v367 = vmul.u32 %v335, 73244475
        %v368 = vmul.u32 %v336, 73244475
        %v369 = vmul.u32 %v337, 73244475
        %v370 = vmul.u32 %v338, 73244475
        %v371 = vmul.u32 %v339, 73244475
        %v372 = vmul.u32 %v340, 73244475
        %v373 = vmul.u32 %v341, 73244475
        %v374 = vmul.u32 %v342, 73244475
        %v375 = vmul.u32 %v343, 73244475
        %v376 = vmul.u32 %v344, 73244475
        %v377 = vmul.u32 %v345, 73244475
        %v378 = vmul.u32 %v346, 73244475
        %v379 = vmul.u32 %v347, 73244475
        %v380 = vmul.u32 %v348, 73244475
        %v381 = vmul.u32 %v349, 73244475
        %v382 = vmul.u32 %v350, 73244475
        %v383 = vmul.u32 %v351, 73244475
        %v384 = vmul.u32 %v352, 73244475
        %v385 = vshrl.u32 %v353, 16
        %v386 = vshrl.u32 %v354, 16
        %v387 = vshrl.u32 %v355, 16
        %v388 = vshrl.u32 %v356, 16
        %v389 = vshrl.u32 %v357, 16
        %v390 = vshrl.u32 %v358, 16
        %v391 = vshrl.u32 %v359, 16
        %v392 = vshrl.u32 %v360, 16
        %v393 = vshrl.u32 %v361, 16
        %v394 = vshrl.u32 %v362, 16
        %v395 = vshrl.u32 %v363, 16
        %v396 = vshrl.u32 %v364, 16
        %v397 = vshrl.u32 %v365, 16
        %v398 = vshrl.u32 %v366, 16
        %v399 = vshrl.u32 %v367, 16
        %v400 = vshrl.u32 %v368, 16
        %v401 = vshrl.u32 %v369, 16
        %v402 = vshrl.u32 %v370, 16
        %v403 = vshrl.u32 %v371, 16
        %v404 = vshrl.u32 %v372, 16
        %v405 = vshrl.u32 %v373, 16
        %v406 = vshrl.u32 %v374, 16
        %v407 = vshrl.u32 %v375, 16
        %v408 = vshrl.u32 %v376, 16
        %v409 = vshrl.u32 %v377, 16
        %v410 = vshrl.u32 %v378, 16
        %v411 = vshrl.u32 %v379, 16
        %v412 = vshrl.u32 %v380, 16
        %v413 = vshrl.u32 %v381, 16
        %v414 = vshrl.u32 %v382, 16
        %v415 = vshrl.u32 %v383, 16
        %v416 = vshrl.u32 %v384, 16
        %v417 = vxor.u32 %v385, %v353
        %v418 = vxor.u32 %v386, %v354
        %v419 = vxor.u32 %v387, %v355
        %v420 = vxor.u32 %v388, %v356
        %v421 = vxor.u32 %v389, %v357
        %v422 = vxor.u32 %v390, %v358
        %v423 = vxor.u32 %v391, %v359
        %v424 = vxor.u32 %v392, %v360
        %v425 = vxor.u32 %v393, %v361
        %v426 = vxor.u32 %v394, %v362
        %v427 = vxor.u32 %v395, %v363
        %v428 = vxor.u32 %v396, %v364
        %v429 = vxor.u32 %v397, %v365
        %v430 = vxor.u32 %v398, %v366
        %v431 = vxor.u32 %v399, %v367
        %v432 = vxor.u32 %v400, %v368
        %v433 = vxor.u32 %v401, %v369
        %v434 = vxor.u32 %v402, %v370
        %v435 = vxor.u32 %v403, %v371
        %v436 = vxor.u32 %v404, %v372
        %v437 = vxor.u32 %v405, %v373
        %v438 = vxor.u32 %v406, %v374
        %v439 = vxor.u32 %v407, %v375
        %v440 = vxor.u32 %v408, %v376
        %v441 = vxor.u32 %v409, %v377
        %v442 = vxor.u32 %v410, %v378
        %v443 = vxor.u32 %v411, %v379
        %v444 = vxor.u32 %v412, %v380
        %v445 = vxor.u32 %v413, %v381
        %v446 = vxor.u32 %v414, %v382
        %v447 = vxor.u32 %v415, %v383
        %v448 = vxor.u32 %v416, %v384
        %v449 = vmul.u32 %v417, 73244475
        %v450 = vmul.u32 %v418, 73244475
        %v451 = vmul.u32 %v419, 73244475
        %v452 = vmul.u32 %v420, 73244475
        %v453 = vmul.u32 %v421, 73244475
        %v454 = vmul.u32 %v422, 73244475
        %v455 = vmul.u32 %v423, 73244475
        %v456 = vmul.u32 %v424, 73244475
        %v457 = vmul.u32 %v425, 73244475
        %v458 = vmul.u32 %v426, 73244475
        %v459 = vmul.u32 %v427, 73244475
        %v460 = vmul.u32 %v428, 73244475
        %v461 = vmul.u32 %v429, 73244475
        %v462 = vmul.u32 %v430, 73244475
        %v463 = vmul.u32 %v431, 73244475
        %v464 = vmul.u32 %v432, 73244475
        %v465 = vmul.u32 %v433, 73244475
        %v466 = vmul.u32 %v434, 73244475
        %v467 = vmul.u32 %v435, 73244475
        %v468 = vmul.u32 %v436, 73244475
        %v469 = vmul.u32 %v437, 73244475
        %v470 = vmul.u32 %v438, 73244475
        %v471 = vmul.u32 %v439, 73244475
        %v472 = vmul.u32 %v440, 73244475
        %v473 = vmul.u32 %v441, 73244475
        %v474 = vmul.u32 %v442, 73244475
        %v475 = vmul.u32 %v443, 73244475
        %v476 = vmul.u32 %v444, 73244475
        %v477 = vmul.u32 %v445, 73244475
        %v478 = vmul.u32 %v446, 73244475
        %v479 = vmul.u32 %v447, 73244475
        %v480 = vmul.u32 %v448, 73244475
        %v481 = vshrl.u32 %v449, 16
        %v482 = vshrl.u32 %v450, 16
        %v483 = vshrl.u32 %v451, 16
        %v484 = vshrl.u32 %v452, 16
        %v485 = vshrl.u32 %v453, 16
        %v486 = vshrl.u32 %v454, 16
        %v487 = vshrl.u32 %v455, 16
        %v488 = vshrl.u32 %v456, 16
        %v489 = vshrl.u32 %v457, 16
        %v490 = vshrl.u32 %v458, 16
        %v491 = vshrl.u32 %v459, 16
        %v492 = vshrl.u32 %v460, 16
        %v493 = vshrl.u32 %v461, 16
        %v494 = vshrl.u32 %v462, 16
        %v495 = vshrl.u32 %v463, 16
        %v496 = vshrl.u32 %v464, 16
        %v497 = vshrl.u32 %v465, 16
        %v498 = vshrl.u32 %v466, 16
        %v499 = vshrl.u32 %v467, 16
        %v500 = vshrl.u32 %v468, 16
        %v501 = vshrl.u32 %v469, 16
        %v502 = vshrl.u32 %v470, 16
        %v503 = vshrl.u32 %v471, 16
        %v504 = vshrl.u32 %v472, 16
        %v505 = vshrl.u32 %v473, 16
        %v506 = vshrl.u32 %v474, 16
        %v507 = vshrl.u32 %v475, 16
        %v508 = vshrl.u32 %v476, 16
        %v509 = vshrl.u32 %v477, 16
        %v510 = vshrl.u32 %v478, 16
        %v511 = vshrl.u32 %v479, 16
        %v512 = vshrl.u32 %v480, 16
        %v513 = vxor.u32 %v481, %v449
        %v514 = vxor.u32 %v482, %v450
        %v515 = vxor.u32 %v483, %v451
        %v516 = vxor.u32 %v484, %v452
        %v517 = vxor.u32 %v485, %v453
        %v518 = vxor.u32 %v486, %v454
        %v519 = vxor.u32 %v487, %v455
        %v520 = vxor.u32 %v488, %v456
        %v521 = vxor.u32 %v489, %v457
        %v522 = vxor.u32 %v490, %v458
        %v523 = vxor.u32 %v491, %v459
        %v524 = vxor.u32 %v492, %v460
        %v525 = vxor.u32 %v493, %v461
        %v526 = vxor.u32 %v494, %v462
        %v527 = vxor.u32 %v495, %v463
        %v528 = vxor.u32 %v496, %v464
        %v529 = vxor.u32 %v497, %v465
        %v530 = vxor.u32 %v498, %v466
        %v531 = vxor.u32 %v499, %v467
        %v532 = vxor.u32 %v500, %v468
        %v533 = vxor.u32 %v501, %v469
        %v534 = vxor.u32 %v502, %v470
        %v535 = vxor.u32 %v503, %v471
        %v536 = vxor.u32 %v504, %v472
        %v537 = vxor.u32 %v505, %v473
        %v538 = vxor.u32 %v506, %v474
        %v539 = vxor.u32 %v507, %v475
        %v540 = vxor.u32 %v508, %v476
        %v541 = vxor.u32 %v509, %v477
        %v542 = vxor.u32 %v510, %v478
        %v543 = vxor.u32 %v511, %v479
        %v544 = vxor.u32 %v512, %v480
        %v545 = vadd.s32 %v513, 2147483648
        %vm547 = vcmp.ge.s32.totalorder %v545, 2576980378
        %v548 = vadd.s32 %v514, 2147483648
        %vm550 = vcmp.ge.s32.totalorder %v548, 2576980378
        %v551 = vadd.s32 %v515, 2147483648
        %vm553 = vcmp.ge.s32.totalorder %v551, 2576980378
        %v554 = vadd.s32 %v516, 2147483648
        %vm556 = vcmp.ge.s32.totalorder %v554, 2576980378
        %v557 = vadd.s32 %v517, 2147483648
        %vm559 = vcmp.ge.s32.totalorder %v557, 2576980378
        %v560 = vadd.s32 %v518, 2147483648
        %vm562 = vcmp.ge.s32.totalorder %v560, 2576980378
        %v563 = vadd.s32 %v519, 2147483648
        %vm565 = vcmp.ge.s32.totalorder %v563, 2576980378
        %v566 = vadd.s32 %v520, 2147483648
        %vm568 = vcmp.ge.s32.totalorder %v566, 2576980378
        %v569 = vadd.s32 %v521, 2147483648
        %vm571 = vcmp.ge.s32.totalorder %v569, 2576980378
        %v572 = vadd.s32 %v522, 2147483648
        %vm574 = vcmp.ge.s32.totalorder %v572, 2576980378
        %v575 = vadd.s32 %v523, 2147483648
        %vm577 = vcmp.ge.s32.totalorder %v575, 2576980378
        %v578 = vadd.s32 %v524, 2147483648
        %vm580 = vcmp.ge.s32.totalorder %v578, 2576980378
        %v581 = vadd.s32 %v525, 2147483648
        %vm583 = vcmp.ge.s32.totalorder %v581, 2576980378
        %v584 = vadd.s32 %v526, 2147483648
        %vm586 = vcmp.ge.s32.totalorder %v584, 2576980378
        %v587 = vadd.s32 %v527, 2147483648
        %vm589 = vcmp.ge.s32.totalorder %v587, 2576980378
        %v590 = vadd.s32 %v528, 2147483648
        %vm592 = vcmp.ge.s32.totalorder %v590, 2576980378
        %v593 = vadd.s32 %v529, 2147483648
        %vm595 = vcmp.ge.s32.totalorder %v593, 2576980378
        %v596 = vadd.s32 %v530, 2147483648
        %vm598 = vcmp.ge.s32.totalorder %v596, 2576980378
        %v599 = vadd.s32 %v531, 2147483648
        %vm601 = vcmp.ge.s32.totalorder %v599, 2576980378
        %v602 = vadd.s32 %v532, 2147483648
        %vm604 = vcmp.ge.s32.totalorder %v602, 2576980378
        %v605 = vadd.s32 %v533, 2147483648
        %vm607 = vcmp.ge.s32.totalorder %v605, 2576980378
        %v608 = vadd.s32 %v534, 2147483648
        %vm610 = vcmp.ge.s32.totalorder %v608, 2576980378
        %v611 = vadd.s32 %v535, 2147483648
        %vm613 = vcmp.ge.s32.totalorder %v611, 2576980378
        %v614 = vadd.s32 %v536, 2147483648
        %vm616 = vcmp.ge.s32.totalorder %v614, 2576980378
        %v617 = vadd.s32 %v537, 2147483648
        %vm619 = vcmp.ge.s32.totalorder %v617, 2576980378
        %v620 = vadd.s32 %v538, 2147483648
        %vm622 = vcmp.ge.s32.totalorder %v620, 2576980378
        %v623 = vadd.s32 %v539, 2147483648
        %vm625 = vcmp.ge.s32.totalorder %v623, 2576980378
        %v626 = vadd.s32 %v540, 2147483648
        %vm628 = vcmp.ge.s32.totalorder %v626, 2576980378
        %v629 = vadd.s32 %v541, 2147483648
        %vm631 = vcmp.ge.s32.totalorder %v629, 2576980378
        %v632 = vadd.s32 %v542, 2147483648
        %vm634 = vcmp.ge.s32.totalorder %v632, 2576980378
        %v635 = vadd.s32 %v543, 2147483648
        %vm637 = vcmp.ge.s32.totalorder %v635, 2576980378
        %v638 = vadd.s32 %v544, 2147483648
        %vm640 = vcmp.ge.s32.totalorder %v638, 2576980378
        %v641 = vld [vmem:[%s144] sm:$0xff]
        %v642 = vld [vmem:[%s144 + $0x8] sm:$0xff]
        %v643 = vld [vmem:[%s144 + $0x10] sm:$0xff]
        %v644 = vld [vmem:[%s144 + $0x18] sm:$0xff]
        %v645 = vld [vmem:[%s144 + $0x20] sm:$0xff]
        %v646 = vld [vmem:[%s144 + $0x28] sm:$0xff]
        %v647 = vld [vmem:[%s144 + $0x30] sm:$0xff]
        %v648 = vld [vmem:[%s144 + $0x38] sm:$0xff]
        %v649 = vld [vmem:[%s144 + $0x40] sm:$0xff]
        %v650 = vld [vmem:[%s144 + $0x48] sm:$0xff]
        %v651 = vld [vmem:[%s144 + $0x50] sm:$0xff]
        %v652 = vld [vmem:[%s144 + $0x58] sm:$0xff]
        %v653 = vld [vmem:[%s144 + $0x60] sm:$0xff]
        %v654 = vld [vmem:[%s144 + $0x68] sm:$0xff]
        %v655 = vld [vmem:[%s144 + $0x70] sm:$0xff]
        %v656 = vld [vmem:[%s144 + $0x78] sm:$0xff]
        %v657 = vld [vmem:[%s144 + $0x80] sm:$0xff]
        %v658 = vld [vmem:[%s144 + $0x88] sm:$0xff]
        %v659 = vld [vmem:[%s144 + $0x90] sm:$0xff]
        %v660 = vld [vmem:[%s144 + $0x98] sm:$0xff]
        %v661 = vld [vmem:[%s144 + $0xa0] sm:$0xff]
        %v662 = vld [vmem:[%s144 + $0xa8] sm:$0xff]
        %v663 = vld [vmem:[%s144 + $0xb0] sm:$0xff]
        %v664 = vld [vmem:[%s144 + $0xb8] sm:$0xff]
        %v665 = vld [vmem:[%s144 + $0xc0] sm:$0xff]
        %v666 = vld [vmem:[%s144 + $0xc8] sm:$0xff]
        %v667 = vld [vmem:[%s144 + $0xd0] sm:$0xff]
        %v668 = vld [vmem:[%s144 + $0xd8] sm:$0xff]
        %v669 = vld [vmem:[%s144 + $0xe0] sm:$0xff]
        %v670 = vld [vmem:[%s144 + $0xe8] sm:$0xff]
        %v671 = vld [vmem:[%s144 + $0xf0] sm:$0xff]
        %v672 = vld [vmem:[%s144 + $0xf8] sm:$0xff]
        %v673 = vmul.f32 %v641, 1.1111112
        %v674 = vmul.f32 %v642, 1.1111112
        %v675 = vmul.f32 %v643, 1.1111112
        %v676 = vmul.f32 %v644, 1.1111112
        %v677 = vmul.f32 %v645, 1.1111112
        %v678 = vmul.f32 %v646, 1.1111112
        %v679 = vmul.f32 %v647, 1.1111112
        %v680 = vmul.f32 %v648, 1.1111112
        %v681 = vmul.f32 %v649, 1.1111112
        %v682 = vmul.f32 %v650, 1.1111112
        %v683 = vmul.f32 %v651, 1.1111112
        %v684 = vmul.f32 %v652, 1.1111112
        %v685 = vmul.f32 %v653, 1.1111112
        %v686 = vmul.f32 %v654, 1.1111112
        %v687 = vmul.f32 %v655, 1.1111112
        %v688 = vmul.f32 %v656, 1.1111112
        %v689 = vmul.f32 %v657, 1.1111112
        %v690 = vmul.f32 %v658, 1.1111112
        %v691 = vmul.f32 %v659, 1.1111112
        %v692 = vmul.f32 %v660, 1.1111112
        %v693 = vmul.f32 %v661, 1.1111112
        %v694 = vmul.f32 %v662, 1.1111112
        %v695 = vmul.f32 %v663, 1.1111112
        %v696 = vmul.f32 %v664, 1.1111112
        %v697 = vmul.f32 %v665, 1.1111112
        %v698 = vmul.f32 %v666, 1.1111112
        %v699 = vmul.f32 %v667, 1.1111112
        %v700 = vmul.f32 %v668, 1.1111112
        %v701 = vmul.f32 %v669, 1.1111112
        %v702 = vmul.f32 %v670, 1.1111112
        %v703 = vmul.f32 %v671, 1.1111112
        %v704 = vmul.f32 %v672, 1.1111112
        %v705 = vsel %vm547, %v673, 0.0
        %v706 = vsel %vm550, %v674, 0.0
        %v707 = vsel %vm553, %v675, 0.0
        %v708 = vsel %vm556, %v676, 0.0
        %v709 = vsel %vm559, %v677, 0.0
        %v710 = vsel %vm562, %v678, 0.0
        %v711 = vsel %vm565, %v679, 0.0
        %v712 = vsel %vm568, %v680, 0.0
        %v713 = vsel %vm571, %v681, 0.0
        %v714 = vsel %vm574, %v682, 0.0
        %v715 = vsel %vm577, %v683, 0.0
        %v716 = vsel %vm580, %v684, 0.0
        %v717 = vsel %vm583, %v685, 0.0
        %v718 = vsel %vm586, %v686, 0.0
        %v719 = vsel %vm589, %v687, 0.0
        %v720 = vsel %vm592, %v688, 0.0
        %v721 = vsel %vm595, %v689, 0.0
        %v722 = vsel %vm598, %v690, 0.0
        %v723 = vsel %vm601, %v691, 0.0
        %v724 = vsel %vm604, %v692, 0.0
        %v725 = vsel %vm607, %v693, 0.0
        %v726 = vsel %vm610, %v694, 0.0
        %v727 = vsel %vm613, %v695, 0.0
        %v728 = vsel %vm616, %v696, 0.0
        %v729 = vsel %vm619, %v697, 0.0
        %v730 = vsel %vm622, %v698, 0.0
        %v731 = vsel %vm625, %v699, 0.0
        %v732 = vsel %vm628, %v700, 0.0
        %v733 = vsel %vm631, %v701, 0.0
        %v734 = vsel %vm634, %v702, 0.0
        %v735 = vsel %vm637, %v703, 0.0
        %v736 = vsel %vm640, %v704, 0.0
        %737 = vst [vmem:[%s165] sm:$0xff] %v705
        %738 = vst [vmem:[%s165 + $0x8] sm:$0xff] %v706
        %739 = vst [vmem:[%s165 + $0x10] sm:$0xff] %v707
        %740 = vst [vmem:[%s165 + $0x18] sm:$0xff] %v708
        %741 = vst [vmem:[%s165 + $0x20] sm:$0xff] %v709
        %742 = vst [vmem:[%s165 + $0x28] sm:$0xff] %v710
        %743 = vst [vmem:[%s165 + $0x30] sm:$0xff] %v711
        %744 = vst [vmem:[%s165 + $0x38] sm:$0xff] %v712
        %745 = vst [vmem:[%s165 + $0x40] sm:$0xff] %v713
        %746 = vst [vmem:[%s165 + $0x48] sm:$0xff] %v714
        %747 = vst [vmem:[%s165 + $0x50] sm:$0xff] %v715
        %748 = vst [vmem:[%s165 + $0x58] sm:$0xff] %v716
        %749 = vst [vmem:[%s165 + $0x60] sm:$0xff] %v717
        %750 = vst [vmem:[%s165 + $0x68] sm:$0xff] %v718
        %751 = vst [vmem:[%s165 + $0x70] sm:$0xff] %v719
        %752 = vst [vmem:[%s165 + $0x78] sm:$0xff] %v720
        %753 = vst [vmem:[%s165 + $0x80] sm:$0xff] %v721
        %754 = vst [vmem:[%s165 + $0x88] sm:$0xff] %v722
        %755 = vst [vmem:[%s165 + $0x90] sm:$0xff] %v723
        %756 = vst [vmem:[%s165 + $0x98] sm:$0xff] %v724
        %757 = vst [vmem:[%s165 + $0xa0] sm:$0xff] %v725
        %758 = vst [vmem:[%s165 + $0xa8] sm:$0xff] %v726
        %759 = vst [vmem:[%s165 + $0xb0] sm:$0xff] %v727
        %760 = vst [vmem:[%s165 + $0xb8] sm:$0xff] %v728
        %761 = vst [vmem:[%s165 + $0xc0] sm:$0xff] %v729
        %762 = vst [vmem:[%s165 + $0xc8] sm:$0xff] %v730
        %763 = vst [vmem:[%s165 + $0xd0] sm:$0xff] %v731
        %764 = vst [vmem:[%s165 + $0xd8] sm:$0xff] %v732
        %765 = vst [vmem:[%s165 + $0xe0] sm:$0xff] %v733
        %766 = vst [vmem:[%s165 + $0xe8] sm:$0xff] %v734
        %767 = vst [vmem:[%s165 + $0xf0] sm:$0xff] %v735
        %768 = vst [vmem:[%s165 + $0xf8] sm:$0xff] %v736
        %s769 = sand.u32 %s75, 1
        %s770 = scalar_lea.sflag [#allocation5], %s769
        %s771 = sand.u32 %s75, 1
        %s772 = smul.addr %s771, 256
        %s773 = scalar_lea.vmem [#allocation6], %s772
        // Predicated region
        $region33: #{tpu_custom_call.1} parent=27 // pred_check
          %p774 = pneg %p85
        $region34: #{tpu_custom_call.1} parent=27 // pred_check_branch
          %776 = sbr.rel (%p774) target = $region36
        $region35: #{tpu_custom_call.1} parent=27 // pred_region
          %s777 = smul.u32 16, %s20
          %779 = vsyncadd %s770, 0
          %s780 = smul.addr %s777, 2
          %s781 = smul.addr %s780, 8
          %s782 = scalar_lea.hbm %s2, %s781
          %s783 = sshll.u32 %s773, 4
          %s784 = int_to_ptr.vmem [resolvable:$true] %s783
          %s785 = sshll.u32 %s782, 4
          %s786 = int_to_ptr.hbm [resolvable:$true] %s785
          %791 = dma.vmem_to_hbm [thread:$0]  %s784, 4096, %s786, %s770, 256, 256, 16
        $region36: #{tpu_custom_call.1} parent=27 // pred_fallthru
          _
      $region28: #{tpu_custom_call.1} parent=5 // pred_fallthru
        _
      %p792 = scmp.le.s32.totalorder 2, %s15
      // Predicated region
      $region37: #{tpu_custom_call.1} parent=5 // pred_check
        %p793 = pneg %p792
      $region38: #{tpu_custom_call.1} parent=5 // pred_check_branch
        %795 = sbr.rel (%p793) target = $region40
      $region39: #{tpu_custom_call.1} parent=5 // pred_region
        %s796 = ssub.s32 %s15, 2
        // Predicated region
        $region41: #{tpu_custom_call.1} parent=39 // pred_check
          %p797 = pneg %p91
        $region42: #{tpu_custom_call.1} parent=39 // pred_check_branch
          %799 = sbr.rel (%p797) target = $region44
        $region43: #{tpu_custom_call.1} parent=39 // pred_region
          %s800 = sand.u32 %s76, 1
          %s801 = scalar_lea.sflag [#allocation5], %s800
          %s802 = sand.u32 %s76, 1
          %s803 = smul.addr %s802, 256
          %s804 = scalar_lea.vmem [#allocation6], %s803
          %806 = dma.done %s801, 4096
        $region44: #{tpu_custom_call.1} parent=39 // pred_fallthru
          _
      $region40: #{tpu_custom_call.1} parent=5 // pred_fallthru
        _
    $region6: #{tpu_custom_call.1} parent=1 // loop_footer
      %s19 = sadd.s32 1, %s15
    $region7: #{tpu_custom_call.1} parent=1 // loop_footer_branch
      %14 = sbr.rel target = $region3
    $region8: #{tpu_custom_call.1} parent=1 // loop_exit
      _
    %807 = vsyncpa [#allocation4], 1
    %s808 = scalar_lea.sflag [#allocation4], 1
    %809 = vsyncpa %s808, 1
    %810 = vsyncpa [#allocation5], 1
    %s811 = scalar_lea.sflag [#allocation5], 1
    %812 = vsyncpa %s811, 1

</llo_original>
